<compile_context>
chip_gen: v5e
topology: v5e:2x2
jax: 0.10.0
libtpu: 0.0.40
codegen_flags: <defaults>
</compile_context>

<pallas_src>
import functools

import jax
import jax.numpy as jnp
from jax import lax
from jax.experimental import pallas as pl
from jax.experimental.pallas import tpu as pltpu

GN_EPS = 1e-5  # torch.nn.GroupNorm default


def _sa_kernel(a_ref, b_ref, rowp_ref, o_ref, *, hw, tj, ch, eps):
    """a_ref/b_ref: (TJ, HW) lower-/upper-half channel rows of one batch item.
    rowp_ref: (C, 3) per-channel gate params [p, q, r], resident (one DMA).
    o_ref: (TJ, 2*HW) -- lanes [0,HW) <- gated(a), lanes [HW,2HW) <- gated(b),
    which is exactly the channel-shuffled layout (NCHW reshape is free)."""
    ji = pl.program_id(1)
    base = pl.multiple_of(ji * tj, 8)          # tj % 8 == 0 -> aligned slice
    inv_hw = 1.0 / float(hw)
    out_dtype = o_ref.dtype

    def gated(x, row0):
        prm = rowp_ref[pl.ds(row0, tj), :]     # (TJ, 3) f32
        p = prm[:, 0:1]
        q = prm[:, 1:2]
        r = prm[:, 2:3]
        xf = x.astype(jnp.float32)
        # Shifted one-pass stats: variance is shift-invariant; the per-row
        # first-element shift avoids catastrophic cancellation when |mean|>>std.
        shift = xf[:, 0:1]
        xc = xf - shift
        s1 = jnp.sum(xc, axis=1, keepdims=True)
        s2 = jnp.sum(xc * xc, axis=1, keepdims=True)
        m_c = s1 * inv_hw
        var = jnp.maximum(s2 * inv_hw - m_c * m_c, 0.0)
        mu = m_c + shift
        rstd = lax.rsqrt(var + eps)
        # Folded gate: sigmoid(p*(x-mu)*rstd + q*mu + r) == sigmoid(alpha*x + beta)
        alpha = p * rstd                       # (TJ, 1)
        beta = q * mu + r - alpha * mu         # (TJ, 1)
        return (xf * jax.nn.sigmoid(alpha * xf + beta)).astype(out_dtype)

    o_ref[:, 0:hw] = gated(a_ref[...], base)
    o_ref[:, hw:2 * hw] = gated(b_ref[...], base + ch)


def _vmem_plan():
    """Generation-aware scoped-VMEM limit and tile (working-set) budget."""
    try:
        cap = int(getattr(pltpu.get_tpu_info(), "vmem_capacity_bytes",
                          64 * 1024 * 1024))
    except Exception:
        cap = 64 * 1024 * 1024                     # conservative: v7x per-TC
    if cap >= 96 * 1024 * 1024:                    # v5e / v6e: 128 MiB VMEM
        return 80 * 1024 * 1024, 40 * 1024 * 1024  # (scoped limit, tile budget)
    else:                                          # v7x: 64 MiB VMEM per TC
        return 36 * 1024 * 1024, 20 * 1024 * 1024


def _pick_row_tile(ch, hw, b, tile_budget, min_grid_steps=8):
    """Largest TJ that (a) divides ch, (b) is a multiple of 8 (sublane rule),
    (c) keeps the double-buffered working set under `tile_budget`, and
    (d) leaves >= min_grid_steps grid steps for megacore sharding (v7x)."""
    per_row = 2 * (4 * hw) * 4                 # db: a(hw)+b(hw)+out(2hw), f32
    row_cap = max(8, (tile_budget // per_row) // 8 * 8)
    want_blocks = max(1, -(-min_grid_steps // b))          # ceil(steps / b)
    par_cap = max(8, (ch // want_blocks) // 8 * 8)
    cap = min(row_cap, par_cap)
    best = None
    for d in range(8, ch + 1, 8):              # 8-aligned divisors of ch
        if ch % d == 0 and d <= cap:
            best = d
    if best is None:
        for d in range(8, ch + 1, 8):          # smallest valid divisor (>= 8)
            if ch % d == 0:
                best = d
                break
    return best


@functools.partial(jax.jit, static_argnames=("groups",))
def sa_layer_forward(x, params, groups):
    """x: (B, C, H, W). params: (C // (2*groups), 6) float32, columns =
    [cweight, cbias, sweight, sbias, gn_gamma, gn_beta]."""
    b, c, h, w = x.shape
    hw = h * w
    assert c % (2 * groups) == 0, "channels must be divisible by 2*groups"
    cpg = c // groups            # channels per group (even)
    c2 = cpg // 2
    ch = c // 2                  # half the channels of one batch item
    # (8,128) sublane rule: row tiles must be multiples of 8.
    assert ch % 8 == 0, "fused kernel requires (channels // 2) % 8 == 0"
    # TODO(synk): add a fallback path for (channels // 2) % 8 != 0.

    # ---- per-channel unified gate params (tiny, computed once in plain JAX) --
    cw, cb, sw, sb, gamma, beta = [params[:, i].astype(jnp.float32)
                                   for i in range(6)]
    zero = jnp.zeros((c2,), jnp.float32)
    p_grp = jnp.concatenate([zero, sw * gamma])              # (cpg,)
    q_grp = jnp.concatenate([cw, zero])
    r_grp = jnp.concatenate([cb, sw * beta + sb])
    rowp = jnp.stack([jnp.tile(p_grp, groups),
                      jnp.tile(q_grp, groups),
                      jnp.tile(r_grp, groups)], axis=1)      # (C, 3) f32

    xr = x.reshape(b * c, hw)                                # metadata-only

    vmem_limit, tile_budget = _vmem_plan()
    tj = _pick_row_tile(ch, hw, b, tile_budget)
    nb = ch // tj                # output / half-channel blocks per batch item
    cb_blocks = c // tj          # input blocks per batch item in xr

    out2d = pl.pallas_call(
        functools.partial(_sa_kernel, hw=hw, tj=tj, ch=ch, eps=GN_EPS),
        out_shape=jax.ShapeDtypeStruct((b * ch, 2 * hw), x.dtype),
        grid_spec=pltpu.PrefetchScalarGridSpec(
            num_scalar_prefetch=0,
            grid=(b, nb),
            in_specs=[
                # lower-half channels of batch bi
                pl.BlockSpec((tj, hw), lambda bi, ji: (bi * cb_blocks + ji, 0)),
                # upper-half channels of batch bi (same array, +ch rows)
                pl.BlockSpec((tj, hw),
                             lambda bi, ji: (bi * cb_blocks + nb + ji, 0)),
                # per-channel gate params, fully resident (constant index_map)
                pl.BlockSpec((c, 3), lambda bi, ji: (0, 0)),
            ],
            out_specs=pl.BlockSpec((tj, 2 * hw),
                                   lambda bi, ji: (bi * nb + ji, 0)),
        ),
        compiler_params=pltpu.CompilerParams(
            dimension_semantics=("parallel", "parallel"),
            vmem_limit_bytes=vmem_limit,
        ),
    )(xr, xr, rowp)

    # (B*C/2, 2*HW) -> (B, C, H, W): metadata-only reshape, already shuffled.
    return out2d.reshape(b, c, h, w)


def _reference(x, params, groups):
    """Pure-JAX reference mirroring the PyTorch forward."""
    b, c, h, w = x.shape
    c2 = c // (2 * groups)
    cw, cb, sw, sb, gamma, beta = [params[:, i].reshape(1, c2, 1, 1)
                                   for i in range(6)]
    xr = x.reshape(b * groups, -1, h, w)
    x0, x1 = xr[:, :c2], xr[:, c2:]
    xn = jnp.mean(x0, axis=(2, 3), keepdims=True)
    xn = x0 * jax.nn.sigmoid(cw * xn + cb)
    mu = jnp.mean(x1, axis=(2, 3), keepdims=True)
    var = jnp.mean((x1 - mu) ** 2, axis=(2, 3), keepdims=True)
    x1n = (x1 - mu) / jnp.sqrt(var + GN_EPS) * gamma + beta
    xs = x1 * jax.nn.sigmoid(sw * x1n + sb)
    out = jnp.concatenate([xn, xs], axis=1).reshape(b, c, h, w)
    out = out.reshape(b, 2, c // 2, h, w).transpose(0, 2, 1, 3, 4)
    return out.reshape(b, c, h, w)


if __name__ == "__main__":
    # small, module-consistent shapes: channels divisible by 2*groups, C/2 % 8 == 0
    B, C, H, W = 2, 16, 16, 16
    GROUPS = 4
    C2 = C // (2 * GROUPS)

    key = jax.random.PRNGKey(0)
    kx, kp = jax.random.split(key)
    x = jax.random.normal(kx, (B, C, H, W), dtype=jnp.float32)
    # random parameters so both branches (affine gate + GroupNorm gate) are exercised
    params = jax.random.normal(kp, (C2, 6), dtype=jnp.float32)

    out = sa_layer_forward(x, params, GROUPS)
    out = jax.block_until_ready(out)

    ref = _reference(x, params, GROUPS)
    assert out.shape == (B, C, H, W)
    assert jnp.allclose(out, ref, atol=2e-5, rtol=2e-5), \
        float(jnp.max(jnp.abs(out - ref)))
    print("KERNEL_OK")
</pallas_src>

<mosaic_0001>
module attributes {stable_mosaic.version = 11 : i64} {
  func.func @_sa_kernel(%arg0: i32, %arg1: i32, %arg2: memref<8x256xf32, #tpu.memory_space<vmem>>, %arg3: memref<8x256xf32, #tpu.memory_space<vmem>>, %arg4: memref<16x3xf32, #tpu.memory_space<vmem>>, %arg5: memref<8x512xf32, #tpu.memory_space<vmem>>) attributes {dimension_semantics = [#tpu.dimension_semantics<parallel>, #tpu.dimension_semantics<parallel>], iteration_bounds = array<i64: 2, 1>, scalar_prefetch = 0 : i64, scratch_operands = 0 : i64, tpu.core_type = #tpu.core_type<tc>, window_params = [{transform_indices = @transform_0, window_bounds = array<i64: 8, 256>}, {transform_indices = @transform_1, window_bounds = array<i64: 8, 256>}, {pipeline_mode = #tpu.pipeline_mode<synchronous>, transform_indices = @transform_2, window_bounds = array<i64: 16, 3>}, {transform_indices = @transform_3, window_bounds = array<i64: 8, 512>}]} {
    %c8_i32 = arith.constant 8 : i32
    %0 = arith.muli %arg1, %c8_i32 : i32
    %1 = tpu.assume_multiple %0, 8 : i32
    %c0 = arith.constant 0 : index
    %c0_0 = arith.constant 0 : index
    %2 = vector.load %arg2[%c0, %c0_0] : memref<8x256xf32, #tpu.memory_space<vmem>>, vector<8x256xf32>
    %3 = arith.index_cast %1 : i32 to index
    %c0_1 = arith.constant 0 : index
    %4 = vector.load %arg4[%3, %c0_1] : memref<16x3xf32, #tpu.memory_space<vmem>>, vector<8x3xf32>
    %5 = vector.extract_strided_slice %4 {offsets = [0, 0], sizes = [8, 1], strides = [1, 1]} : vector<8x3xf32> to vector<8x1xf32>
    %6 = vector.extract_strided_slice %4 {offsets = [0, 1], sizes = [8, 1], strides = [1, 1]} : vector<8x3xf32> to vector<8x1xf32>
    %7 = vector.extract_strided_slice %4 {offsets = [0, 2], sizes = [8, 1], strides = [1, 1]} : vector<8x3xf32> to vector<8x1xf32>
    %8 = vector.extract_strided_slice %2 {offsets = [0, 0], sizes = [8, 1], strides = [1, 1]} : vector<8x256xf32> to vector<8x1xf32>
    %9 = vector.broadcast %8 : vector<8x1xf32> to vector<8x256xf32>
    %10 = arith.subf %2, %9 : vector<8x256xf32>
    %cst = arith.constant dense<0.000000e+00> : vector<8xf32>
    %11 = vector.multi_reduction <add>, %10, %cst [1] : vector<8x256xf32> to vector<8xf32>
    %12 = vector.shape_cast %11 : vector<8xf32> to vector<8x1xf32>
    %13 = arith.mulf %10, %10 : vector<8x256xf32>
    %cst_2 = arith.constant dense<0.000000e+00> : vector<8xf32>
    %14 = vector.multi_reduction <add>, %13, %cst_2 [1] : vector<8x256xf32> to vector<8xf32>
    %15 = vector.shape_cast %14 : vector<8xf32> to vector<8x1xf32>
    %cst_3 = arith.constant 3.906250e-03 : f32
    %16 = vector.broadcast %cst_3 : f32 to vector<8x1xf32>
    %17 = arith.mulf %12, %16 : vector<8x1xf32>
    %cst_4 = arith.constant 3.906250e-03 : f32
    %18 = vector.broadcast %cst_4 : f32 to vector<8x1xf32>
    %19 = arith.mulf %15, %18 : vector<8x1xf32>
    %20 = arith.mulf %17, %17 : vector<8x1xf32>
    %21 = arith.subf %19, %20 : vector<8x1xf32>
    %cst_5 = arith.constant 0.000000e+00 : f32
    %22 = vector.broadcast %cst_5 : f32 to vector<8x1xf32>
    %23 = arith.maximumf %21, %22 : vector<8x1xf32>
    %24 = arith.addf %17, %8 : vector<8x1xf32>
    %cst_6 = arith.constant 9.99999974E-6 : f32
    %25 = vector.broadcast %cst_6 : f32 to vector<8x1xf32>
    %26 = arith.addf %23, %25 : vector<8x1xf32>
    %27 = math.rsqrt %26 : vector<8x1xf32>
    %28 = arith.mulf %5, %27 : vector<8x1xf32>
    %29 = arith.mulf %6, %24 : vector<8x1xf32>
    %30 = arith.addf %29, %7 : vector<8x1xf32>
    %31 = arith.mulf %28, %24 : vector<8x1xf32>
    %32 = arith.subf %30, %31 : vector<8x1xf32>
    %33 = vector.broadcast %28 : vector<8x1xf32> to vector<8x256xf32>
    %34 = arith.mulf %33, %2 : vector<8x256xf32>
    %35 = vector.broadcast %32 : vector<8x1xf32> to vector<8x256xf32>
    %36 = arith.addf %34, %35 : vector<8x256xf32>
    %37 = arith.negf %36 : vector<8x256xf32>
    %38 = math.exp %37 : vector<8x256xf32>
    %cst_7 = arith.constant 1.000000e+00 : f32
    %39 = vector.broadcast %cst_7 : f32 to vector<8x256xf32>
    %40 = arith.addf %39, %38 : vector<8x256xf32>
    %41 = arith.divf %39, %40 : vector<8x256xf32>
    %42 = arith.mulf %2, %41 : vector<8x256xf32>
    %c0_8 = arith.constant 0 : index
    %c0_9 = arith.constant 0 : index
    %43 = vector.load %arg5[%c0_8, %c0_9] : memref<8x512xf32, #tpu.memory_space<vmem>>, vector<8x256xf32>
    tpu.vector_store %arg5[%c0_8, %c0_9], %42 {strides = array<i32>} : memref<8x512xf32, #tpu.memory_space<vmem>>, vector<8x256xf32>,
    %c0_10 = arith.constant 0 : index
    %c0_11 = arith.constant 0 : index
    %44 = vector.load %arg3[%c0_10, %c0_11] : memref<8x256xf32, #tpu.memory_space<vmem>>, vector<8x256xf32>
    %c8_i32_12 = arith.constant 8 : i32
    %45 = arith.addi %1, %c8_i32_12 : i32
    %46 = arith.index_cast %45 : i32 to index
    %c0_13 = arith.constant 0 : index
    %47 = vector.load %arg4[%46, %c0_13] : memref<16x3xf32, #tpu.memory_space<vmem>>, vector<8x3xf32>
    %48 = vector.extract_strided_slice %47 {offsets = [0, 0], sizes = [8, 1], strides = [1, 1]} : vector<8x3xf32> to vector<8x1xf32>
    %49 = vector.extract_strided_slice %47 {offsets = [0, 1], sizes = [8, 1], strides = [1, 1]} : vector<8x3xf32> to vector<8x1xf32>
    %50 = vector.extract_strided_slice %47 {offsets = [0, 2], sizes = [8, 1], strides = [1, 1]} : vector<8x3xf32> to vector<8x1xf32>
    %51 = vector.extract_strided_slice %44 {offsets = [0, 0], sizes = [8, 1], strides = [1, 1]} : vector<8x256xf32> to vector<8x1xf32>
    %52 = vector.broadcast %51 : vector<8x1xf32> to vector<8x256xf32>
    %53 = arith.subf %44, %52 : vector<8x256xf32>
    %cst_14 = arith.constant dense<0.000000e+00> : vector<8xf32>
    %54 = vector.multi_reduction <add>, %53, %cst_14 [1] : vector<8x256xf32> to vector<8xf32>
    %55 = vector.shape_cast %54 : vector<8xf32> to vector<8x1xf32>
    %56 = arith.mulf %53, %53 : vector<8x256xf32>
    %cst_15 = arith.constant dense<0.000000e+00> : vector<8xf32>
    %57 = vector.multi_reduction <add>, %56, %cst_15 [1] : vector<8x256xf32> to vector<8xf32>
    %58 = vector.shape_cast %57 : vector<8xf32> to vector<8x1xf32>
    %cst_16 = arith.constant 3.906250e-03 : f32
    %59 = vector.broadcast %cst_16 : f32 to vector<8x1xf32>
    %60 = arith.mulf %55, %59 : vector<8x1xf32>
    %cst_17 = arith.constant 3.906250e-03 : f32
    %61 = vector.broadcast %cst_17 : f32 to vector<8x1xf32>
    %62 = arith.mulf %58, %61 : vector<8x1xf32>
    %63 = arith.mulf %60, %60 : vector<8x1xf32>
    %64 = arith.subf %62, %63 : vector<8x1xf32>
    %cst_18 = arith.constant 0.000000e+00 : f32
    %65 = vector.broadcast %cst_18 : f32 to vector<8x1xf32>
    %66 = arith.maximumf %64, %65 : vector<8x1xf32>
    %67 = arith.addf %60, %51 : vector<8x1xf32>
    %cst_19 = arith.constant 9.99999974E-6 : f32
    %68 = vector.broadcast %cst_19 : f32 to vector<8x1xf32>
    %69 = arith.addf %66, %68 : vector<8x1xf32>
    %70 = math.rsqrt %69 : vector<8x1xf32>
    %71 = arith.mulf %48, %70 : vector<8x1xf32>
    %72 = arith.mulf %49, %67 : vector<8x1xf32>
    %73 = arith.addf %72, %50 : vector<8x1xf32>
    %74 = arith.mulf %71, %67 : vector<8x1xf32>
    %75 = arith.subf %73, %74 : vector<8x1xf32>
    %76 = vector.broadcast %71 : vector<8x1xf32> to vector<8x256xf32>
    %77 = arith.mulf %76, %44 : vector<8x256xf32>
    %78 = vector.broadcast %75 : vector<8x1xf32> to vector<8x256xf32>
    %79 = arith.addf %77, %78 : vector<8x256xf32>
    %80 = arith.negf %79 : vector<8x256xf32>
    %81 = math.exp %80 : vector<8x256xf32>
    %cst_20 = arith.constant 1.000000e+00 : f32
    %82 = vector.broadcast %cst_20 : f32 to vector<8x256xf32>
    %83 = arith.addf %82, %81 : vector<8x256xf32>
    %84 = arith.divf %82, %83 : vector<8x256xf32>
    %85 = arith.mulf %44, %84 : vector<8x256xf32>
    %c0_21 = arith.constant 0 : index
    %c256 = arith.constant 256 : index
    %86 = vector.load %arg5[%c0_21, %c256] : memref<8x512xf32, #tpu.memory_space<vmem>>, vector<8x256xf32>
    tpu.vector_store %arg5[%c0_21, %c256], %85 {strides = array<i32>} : memref<8x512xf32, #tpu.memory_space<vmem>>, vector<8x256xf32>,
    return
  }
  func.func @transform_0(%arg0: i32, %arg1: i32) -> (i32, i32) {
    %c2_i32 = arith.constant 2 : i32
    %0 = arith.muli %arg0, %c2_i32 : i32
    %1 = arith.addi %0, %arg1 : i32
    %c0_i32 = arith.constant 0 : i32
    %c0_i32_0 = arith.constant 0 : i32
    return %1, %c0_i32 : i32, i32
  }
  func.func @transform_1(%arg0: i32, %arg1: i32) -> (i32, i32) {
    %c2_i32 = arith.constant 2 : i32
    %0 = arith.muli %arg0, %c2_i32 : i32
    %c1_i32 = arith.constant 1 : i32
    %1 = arith.addi %0, %c1_i32 : i32
    %2 = arith.addi %1, %arg1 : i32
    %c0_i32 = arith.constant 0 : i32
    %c0_i32_0 = arith.constant 0 : i32
    return %2, %c0_i32 : i32, i32
  }
  func.func @transform_2(%arg0: i32, %arg1: i32) -> (i32, i32) {
    %c0_i32 = arith.constant 0 : i32
    %c0_i32_0 = arith.constant 0 : i32
    %c0_i32_1 = arith.constant 0 : i32
    return %c0_i32, %c0_i32_0 : i32, i32
  }
  func.func @transform_3(%arg0: i32, %arg1: i32) -> (i32, i32) {
    %c1_i32 = arith.constant 1 : i32
    %0 = arith.muli %arg0, %c1_i32 : i32
    %1 = arith.addi %0, %arg1 : i32
    %c0_i32 = arith.constant 0 : i32
    %c0_i32_0 = arith.constant 0 : i32
    return %1, %c0_i32 : i32, i32
  }
}

</mosaic_0001>

<llo_original>
// kernel: tile.26
$region0: #{tile.26}
  #allocation0 [shape = 's32[1]{0}', space=sflag, size = 0x4, scoped, tag = 'scoped memory for tile.26']
  %s0 = inlined_call_operand.vmem [shape: f32[4], index: 0, kind: input, shape index: {}]
  %s1 = inlined_call_operand.vmem [shape: f32[4,4], index: 1, kind: output, shape index: {}]
  // Predicated region
  $region2: #{tile.26} parent=0 // pred_check
    _
  $region3: #{tile.26} parent=0 // pred_check_branch
    %3 = sbr.rel (0) target = $region5
  $region4: #{tile.26} parent=0 // pred_region
    _
  $region5: #{tile.26} parent=0 // pred_fallthru
    _
  %v4 = vld [vmem:[%s0] ss:$0 sm:$0xff]
  %5 = vst [vmem:[%s1] sm:$0xf] %v4

// kernel: tile.29
$region0: #{tile.29}
  %s0 = inlined_call_operand.vmem [shape: f32[4,4], index: 0, kind: input, shape index: {}]
  %s1 = inlined_call_operand.vmem [shape: f32[16,1], index: 1, kind: output, shape index: {}]
  $region1: #{tile.29} parent=0
    #allocation0 [shape = 'u8[4096]{0}', space=vmem, size = 0x1000, scoped, tag = 'scoped mem for output reshape']
    #allocation1 [shape = 'u8[4096]{0}', space=vmem, size = 0x1000, scoped, tag = 'scoped mem for input reshape']
    %s3 = ssub.s32 16, 1
    %v4 = vld [vmem:[%s0] sm:%s3]
    %5 = vst [vmem:[#allocation1] sm:%s3] %v4
    %v6 = vld [vmem:[#allocation1] sm:$0x1]
    %vm7 = vcmask 31744
    %8 = vst.msk [vmem:[#allocation0] sm:$0x1] %vm7, %v6
    %s9 = scalar_lea.vmem [#allocation1], 3
    %v10 = vld [vmem:[%s9] sm:$0x1]
    %11 = vrot.lane.b32.xlu0 %v10, 12
    %v12 = vpop.permute.xlu0 %11
    %vm13 = vcmask 130144
    %14 = vst.msk [vmem:[#allocation0] sm:$0x1] %vm13, %v12
    %s15 = scalar_lea.vmem [#allocation1], 2
    %v16 = vld [vmem:[%s15] sm:$0x1]
    %17 = vrot.lane.b32.xlu0 %v16, 8
    %v18 = vpop.permute.xlu0 %17
    %vm19 = vcmask 97344
    %20 = vst.msk [vmem:[#allocation0] sm:$0x1] %vm19, %v18
    %s21 = scalar_lea.vmem [#allocation1], 1
    %v22 = vld [vmem:[%s21] sm:$0x1]
    %23 = vrot.lane.b32.xlu0 %v22, 4
    %v24 = vpop.permute.xlu0 %23
    %vm25 = vcmask 64544
    %26 = vst.msk [vmem:[#allocation0] sm:$0x1] %vm25, %v24
    %s28 = ssub.s32 2, 1
    %v29 = vld [vmem:[#allocation0] sm:%s28]
    %s31 = ssub.s32 2, 1
    %32 = vst [vmem:[%s1] sm:%s31] %v29

// kernel: sa_layer_forward.1
$region0: #{sa_layer_forward.1}
  #allocation0 [shape = 'u32[]', space=smem, size = 0x4, offset = 0x4, fixed_abs, tag = 'smem constant byte address 0x4 - core index']
  #allocation1 [shape = 'u32[72,128]{1,0:T(1,128)}', space=vmem, size = 0x9000, scoped, tag = 'internal scratch']
  %s0 = inlined_call_operand.vmem [shape: f32[32,256], index: 0, kind: input, shape index: {}, may-alias: {0,1}]
  %s1 = inlined_call_operand.vmem [shape: f32[32,256], index: 1, kind: input, shape index: {}, may-alias: {0,1}]
  %s2 = inlined_call_operand.vmem [shape: f32[16,3], index: 2, kind: input, shape index: {}]
  %s3 = inlined_call_operand.vmem [shape: f32[16,512], index: 3, kind: output, shape index: {}]
  %s4 = sld [smem:[#allocation0]]
  $region45: #{sa_layer_forward.1} parent=0
    _
  %s6 = ssub.s32 1, %s4
  %s7 = scalar_select 0, %s6, %s4
  loop: start=0, step=1, limit=4
  $region2: #{sa_layer_forward.1} parent=0 // loop_pre_header
    _
  $region3: #{sa_layer_forward.1} parent=0 // loop_header
    %s9 = sphi 0, %s13
    %p10 = scmp.ge.s32.totalorder %s9, 4
    %s16 = sphi 0, %s28
    %s17 = sphi 0, %s24
    %s18 = sphi 0, %s16
    %s19 = sphi 0, %s17
    %s20 = sphi 0, %s18
    %s21 = sphi 0, %s19
    %s35 = sphi 0, %s37
    %s38 = sphi 0, %s35
    %s39 = sphi 0, %s38
    %s55 = sphi 0, %s39
    %s67 = sphi 0, %s69
    %s70 = sphi 0, %s67
    %s71 = sphi 0, %s70
    %s87 = sphi 0, %s71
    %s91 = sphi 0, %s91
    %s93 = sphi 0, %s91
    %s94 = sphi 0, %s93
    %s108 = sphi 0, %s94
    %s116 = sphi 0, %s118
    %s119 = sphi 0, %s116
    %s120 = sphi 0, %s119
    %s136 = sphi 0, %s120
  $region4: #{sa_layer_forward.1} parent=0 // loop_header_branch
    %12 = sbr.rel (%p10) target = $region8
  $region5: #{sa_layer_forward.1} parent=0 // loop_body
    %s14 = ssub.s32 %s9, 1
    %s15 = ssub.s32 %s9, 2
    %s22 = sadd.s32 1, %s17
    %p23 = scmp.ge.s32.totalorder %s22, 1
    %s24 = scalar_select %p23, 0, %s22
    %s25 = sadd.s32 1, %s16
    %s26 = scalar_select %p23, %s25, %s16
    %p27 = scmp.ge.s32.totalorder %s26, 2
    %s28 = scalar_select %p27, 0, %s26
    %s29 = smul.u32 %s16, 2
    %s30 = sadd.s32 %s29, %s17
    %s31 = smul.u32 %s28, 2
    %s32 = sadd.s32 %s31, %s24
    %s33 = ssub.s32 %s30, %s32
    %p34 = scmp.eq.s32.totalorder %s33, 0
    %s36 = sadd.s32 %s35, 1
    %s37 = scalar_select %p34, %s35, %s36
    %p40 = pneg %p34
    %p41 = scmp.eq.s32.totalorder %s9, 1
    %p42 = por %p40, %p41
    %p43 = scmp.ne.s32.totalorder %s35, %s38
    %p44 = scmp.eq.s32.totalorder %s9, 0
    %p45 = por %p43, %p44
    %p46 = scmp.ne.s32.totalorder %s35, %s38
    %p47 = scmp.eq.s32.totalorder %s14, 1
    %p48 = por %p46, %p47
    %p49 = scmp.ne.s32.totalorder %s38, %s39
    %p50 = scmp.eq.s32.totalorder %s14, 0
    %p51 = por %p49, %p50
    %p52 = scmp.ne.s32.totalorder %s38, %s39
    %p53 = scmp.eq.s32.totalorder %s15, 1
    %p54 = por %p52, %p53
    %p56 = scmp.ne.s32.totalorder %s39, %s55
    %p57 = scmp.eq.s32.totalorder %s15, 0
    %p58 = por %p56, %p57
    %s59 = smul.u32 %s16, 2
    %s60 = sadd.s32 %s59, 1
    %s61 = sadd.s32 %s60, %s17
    %s62 = smul.u32 %s28, 2
    %s63 = sadd.s32 %s62, 1
    %s64 = sadd.s32 %s63, %s24
    %s65 = ssub.s32 %s61, %s64
    %p66 = scmp.eq.s32.totalorder %s65, 0
    %s68 = sadd.s32 %s67, 1
    %s69 = scalar_select %p66, %s67, %s68
    %p72 = pneg %p66
    %p73 = scmp.eq.s32.totalorder %s9, 1
    %p74 = por %p72, %p73
    %p75 = scmp.ne.s32.totalorder %s67, %s70
    %p76 = scmp.eq.s32.totalorder %s9, 0
    %p77 = por %p75, %p76
    %p78 = scmp.ne.s32.totalorder %s67, %s70
    %p79 = scmp.eq.s32.totalorder %s14, 1
    %p80 = por %p78, %p79
    %p81 = scmp.ne.s32.totalorder %s70, %s71
    %p82 = scmp.eq.s32.totalorder %s14, 0
    %p83 = por %p81, %p82
    %p84 = scmp.ne.s32.totalorder %s70, %s71
    %p85 = scmp.eq.s32.totalorder %s15, 1
    %p86 = por %p84, %p85
    %p88 = scmp.ne.s32.totalorder %s71, %s87
    %p89 = scmp.eq.s32.totalorder %s15, 0
    %p90 = por %p88, %p89
    %s92 = sadd.s32 %s91, 1
    %p95 = scmp.eq.s32.totalorder %s9, 1
    %p96 = scmp.ne.s32.totalorder %s91, %s93
    %p97 = scmp.eq.s32.totalorder %s9, 0
    %p98 = por %p96, %p97
    %p99 = scmp.ne.s32.totalorder %s91, %s93
    %p100 = scmp.eq.s32.totalorder %s14, 1
    %p101 = por %p99, %p100
    %p102 = scmp.ne.s32.totalorder %s93, %s94
    %p103 = scmp.eq.s32.totalorder %s14, 0
    %p104 = por %p102, %p103
    %p105 = scmp.ne.s32.totalorder %s93, %s94
    %p106 = scmp.eq.s32.totalorder %s15, 1
    %p107 = por %p105, %p106
    %p109 = scmp.ne.s32.totalorder %s94, %s108
    %p110 = scmp.eq.s32.totalorder %s15, 0
    %p111 = por %p109, %p110
    %s112 = sadd.s32 %s16, %s17
    %s113 = sadd.s32 %s28, %s24
    %s114 = ssub.s32 %s112, %s113
    %p115 = scmp.eq.s32.totalorder %s114, 0
    %s117 = sadd.s32 %s116, 1
    %s118 = scalar_select %p115, %s116, %s117
    %p121 = pneg %p115
    %p122 = scmp.eq.s32.totalorder %s9, 1
    %p123 = por %p121, %p122
    %p124 = scmp.ne.s32.totalorder %s116, %s119
    %p125 = scmp.eq.s32.totalorder %s9, 0
    %p126 = por %p124, %p125
    %p127 = scmp.ne.s32.totalorder %s116, %s119
    %p128 = scmp.eq.s32.totalorder %s14, 1
    %p129 = por %p127, %p128
    %p130 = scmp.ne.s32.totalorder %s119, %s120
    %p131 = scmp.eq.s32.totalorder %s14, 0
    %p132 = por %p130, %p131
    %p133 = scmp.ne.s32.totalorder %s119, %s120
    %p134 = scmp.eq.s32.totalorder %s15, 1
    %p135 = por %p133, %p134
    %p137 = scmp.ne.s32.totalorder %s120, %s136
    %p138 = scmp.eq.s32.totalorder %s15, 0
    %p139 = por %p137, %p138
    %p140 = scmp.le.s32.totalorder 1, %s9
    %p141 = scmp.lt.s32.totalorder %s9, 3
    %p142 = pnand %p140, %p141
    %p143 = pneg %p142
    // Predicated region
    $region9: #{sa_layer_forward.1} parent=5 // pred_check
      _
    $region10: #{sa_layer_forward.1} parent=5 // pred_check_branch
      %145 = sbr.rel (%p142) target = $region12
    $region11: #{sa_layer_forward.1} parent=5 // pred_region
      %s146 = ssub.s32 %s9, 1
      // Predicated region
      $region13: #{sa_layer_forward.1} parent=11 // pred_check
        %p147 = pneg %p104
      $region14: #{sa_layer_forward.1} parent=11 // pred_check_branch
        %149 = sbr.rel (%p147) target = $region16
      $region15: #{sa_layer_forward.1} parent=11 // pred_region
        _
      $region16: #{sa_layer_forward.1} parent=11 // pred_fallthru
        _
    $region12: #{sa_layer_forward.1} parent=5 // pred_fallthru
      _
    %p150 = scmp.lt.s32.totalorder %s9, 2
    // Predicated region
    $region17: #{sa_layer_forward.1} parent=5 // pred_check
      %p151 = pneg %p150
    $region18: #{sa_layer_forward.1} parent=5 // pred_check_branch
      %153 = sbr.rel (%p151) target = $region20
    $region19: #{sa_layer_forward.1} parent=5 // pred_region
      // Predicated region
      $region21: #{sa_layer_forward.1} parent=19 // pred_check
        %p154 = pneg %p45
      $region22: #{sa_layer_forward.1} parent=19 // pred_check_branch
        %156 = sbr.rel (%p154) target = $region24
      $region23: #{sa_layer_forward.1} parent=19 // pred_region
        %s157 = smul.u32 %s16, 2
        %s158 = sadd.s32 %s157, %s17
        %p159 = scmp.lt.s32.totalorder %s158, 3
        %s160 = scalar_select %p159, %s158, 3
        %s161 = smul.addr %s160, 2
        %s162 = smul.addr %s161, 8
        %s163 = scalar_lea.vmem %s0, %s162
        %s164 = smul.u32 %s16, 2
        %s165 = sadd.s32 %s164, %s17
      $region24: #{sa_layer_forward.1} parent=19 // pred_fallthru
        _
      // Predicated region
      $region25: #{sa_layer_forward.1} parent=19 // pred_check
        %p166 = pneg %p77
      $region26: #{sa_layer_forward.1} parent=19 // pred_check_branch
        %168 = sbr.rel (%p166) target = $region28
      $region27: #{sa_layer_forward.1} parent=19 // pred_region
        %s169 = smul.u32 %s16, 2
        %s170 = sadd.s32 %s169, 1
        %s171 = sadd.s32 %s170, %s17
        %p172 = scmp.lt.s32.totalorder %s171, 3
        %s173 = scalar_select %p172, %s171, 3
        %s174 = smul.addr %s173, 2
        %s175 = smul.addr %s174, 8
        %s176 = scalar_lea.vmem %s1, %s175
        %s177 = smul.u32 %s16, 2
        %s178 = sadd.s32 %s177, 1
        %s179 = sadd.s32 %s178, %s17
      $region28: #{sa_layer_forward.1} parent=19 // pred_fallthru
        _
    $region20: #{sa_layer_forward.1} parent=5 // pred_fallthru
      _
    %p180 = scmp.le.s32.totalorder 1, %s9
    %p181 = scmp.lt.s32.totalorder %s9, 3
    %p182 = pnand %p180, %p181
    %p183 = pneg %p182
    // Predicated region
    $region29: #{sa_layer_forward.1} parent=5 // pred_check
      _
    $region30: #{sa_layer_forward.1} parent=5 // pred_check_branch
      %185 = sbr.rel (%p182) target = $region32
    $region31: #{sa_layer_forward.1} parent=5 // pred_region
      %s186 = ssub.s32 %s9, 1
      %s187 = smul.u32 %s18, 2
      %s188 = sadd.s32 %s187, %s19
      %p189 = scmp.lt.s32.totalorder %s188, 3
      %s190 = scalar_select %p189, %s188, 3
      %s191 = smul.addr %s190, 2
      %s192 = smul.addr %s191, 8
      %s193 = scalar_lea.vmem %s0, %s192
      %p194 = pneg %p51
      %p195 = pneg %p48
      %s196 = smul.u32 %s18, 2
      %s197 = sadd.s32 %s196, 1
      %s198 = sadd.s32 %s197, %s19
      %p199 = scmp.lt.s32.totalorder %s198, 3
      %s200 = scalar_select %p199, %s198, 3
      %s201 = smul.addr %s200, 2
      %s202 = smul.addr %s201, 8
      %s203 = scalar_lea.vmem %s1, %s202
      %p204 = pneg %p83
      %p205 = pneg %p80
      %p206 = pneg %p104
      %p207 = pneg %p101
      %p208 = pneg %p132
      %p209 = pneg %p129
      %s210 = sadd.s32 %s18, %s19
      %p211 = scmp.lt.s32.totalorder %s210, 1
      %s212 = scalar_select %p211, %s210, 1
      %s213 = smul.addr %s212, 4
      %s214 = smul.addr %s213, 8
      %s215 = scalar_lea.vmem %s3, %s214
      %s216 = smul.u32 %s18, 2
      %s217 = sadd.s32 %s216, %s19
      %p218 = scmp.lt.s32.totalorder %s217, 3
      %s219 = scalar_select %p218, %s217, 3
      %s220 = smul.addr %s219, 2
      %s221 = smul.addr %s220, 8
      %s222 = scalar_lea.vmem %s0, %s221
      %s223 = smul.u32 %s18, 2
      %s224 = sadd.s32 %s223, %s19
      %s225 = smul.u32 %s18, 2
      %s226 = sadd.s32 %s225, 1
      %s227 = sadd.s32 %s226, %s19
      %p228 = scmp.lt.s32.totalorder %s227, 3
      %s229 = scalar_select %p228, %s227, 3
      %s230 = smul.addr %s229, 2
      %s231 = smul.addr %s230, 8
      %s232 = scalar_lea.vmem %s1, %s231
      %s233 = smul.u32 %s18, 2
      %s234 = sadd.s32 %s233, 1
      %s235 = sadd.s32 %s234, %s19
      %s236 = sadd.s32 %s18, %s19
      %p237 = scmp.lt.s32.totalorder %s236, 1
      %s238 = scalar_select %p237, %s236, 1
      %s239 = smul.addr %s238, 4
      %s240 = smul.addr %s239, 8
      %s241 = scalar_lea.vmem %s3, %s240
      %s242 = sadd.s32 %s18, %s19
      %s243 = smul.u32 %s19, 8
      %v244 = vld [vmem:[%s222] sm:$0xff]
      %v245 = vld [vmem:[%s222 + $0x8] sm:$0xff]
      %s246 = scalar_lea.vmem %s2, %s243
      %v247 = vld [vmem:[%s246] sm:$0xff]
      %249 = vset.pattern.permute.xlu0 0
      %250 = vperm.xlu0 %249, %v244
      %v251 = vpop.permute.xlu0 %250
      %v253 = vsub.f32 %v244, %v251
      %v254 = vsub.f32 %v245, %v251
      %v255 = vadd.f32 %v253, %v254
      %256 = vadd.xlane.f32.xlu0 %v255
      %v257 = vpop.xlane.xlu0 %256
      %v258 = vmul.f32 %v253, %v253
      %v259 = vmul.f32 %v254, %v254
      %v260 = vadd.f32 %v258, %v259
      %261 = vadd.xlane.f32.xlu0 %v260
      %v262 = vpop.xlane.xlu0 %261
      %v263 = vmul.f32 %v257, 0.00390625
      %v264 = vmul.f32 %v262, 0.00390625
      %v265 = vmul.f32 %v263, %v263
      %v266 = vsub.f32 %v264, %v265
      %v267 = vmax.f32 %v266, 0.0
      %v268 = vadd.f32 %v263, %v244
      %v269 = vadd.f32 %v267, 1e-05
      %v270 = vrsqrt.pop %v269
      %v271 = vmul.f32 %v270, %v269
      %v272 = vmul.f32 %v271, %v270
      %v273 = vmul.f32 0.5, %v272
      %v274 = vsub.f32 1.5, %v273
      %v275 = vmul.f32 %v270, %v274
      %vm276 = vweird.f32 %v269
      %vm277 = vweird.f32 %v270
      %vm278 = vmor %vm276, %vm277
      %v279 = vsel %vm278, %v270, %v275
      %v280 = vmul.f32 %v247, %v279
      %282 = vrot.lane.b32.xlu0 %v268, 1
      %v283 = vpop.permute.xlu0 %282
      %v285 = vmul.f32 %v247, %v283
      %287 = vrot.lane.b32.xlu0 %v247, 127
      %v288 = vpop.permute.xlu0 %287
      %v290 = vadd.f32 %v285, %v288
      %v291 = vmul.f32 %v280, %v268
      %293 = vrot.lane.b32.xlu0 %v291, 1
      %v294 = vpop.permute.xlu0 %293
      %v296 = vsub.f32 %v290, %v294
      %298 = vset.pattern.permute.xlu0 0
      %299 = vperm.xlu0 %298, %v280
      %v300 = vpop.permute.xlu0 %299
      %v302 = vmul.f32 %v300, %v244
      %v303 = vmul.f32 %v300, %v245
      %305 = vset.pattern.permute.xlu0 1
      %306 = vperm.xlu0 %305, %v296
      %v307 = vpop.permute.xlu0 %306
      %v309 = vadd.f32 %v302, %v307
      %v310 = vadd.f32 %v303, %v307
      %v311 = vxor.u32 %v309, 2147483648
      %v312 = vxor.u32 %v310, 2147483648
      %v313 = vmul.f32 %v311, 1.442695
      %v314 = vpow.pop %v313
      %v315 = vmul.f32 %v312, 1.442695
      %v316 = vpow.pop %v315
      %v317 = vadd.f32 %v314, 1.0
      %v318 = vadd.f32 %v316, 1.0
      %v319 = vrcp.pop %v317
      %v320 = vmul.f32 %v317, %v319
      %v321 = vsub.f32 1.0, %v320
      %v322 = vmul.f32 %v319, %v321
      %v323 = vadd.f32 %v319, %v322
      %vm324 = vweird.f32 %v317
      %vm325 = vweird.f32 %v319
      %vm326 = vmor %vm324, %vm325
      %v327 = vsel %vm326, %v319, %v323
      %v328 = vand.u32 2147483647, %v317
      %vm329 = vcmp.eq.f32.partialorder %v328, 8.507059e+37
      %v330 = vand.u32 %v317, 2147483648
      %v331 = vor.u32 1.1754944e-38, %v330
      %v332 = vsel %vm329, %v331, %v327
      %v333 = vmul.f32 1.0, %v332
      %v334 = vrcp.pop %v318
      %v335 = vmul.f32 %v318, %v334
      %v336 = vsub.f32 1.0, %v335
      %v337 = vmul.f32 %v334, %v336
      %v338 = vadd.f32 %v334, %v337
      %vm339 = vweird.f32 %v318
      %vm340 = vweird.f32 %v334
      %vm341 = vmor %vm339, %vm340
      %v342 = vsel %vm341, %v334, %v338
      %v343 = vand.u32 2147483647, %v318
      %vm344 = vcmp.eq.f32.partialorder %v343, 8.507059e+37
      %v345 = vand.u32 %v318, 2147483648
      %v346 = vor.u32 1.1754944e-38, %v345
      %v347 = vsel %vm344, %v346, %v342
      %v348 = vmul.f32 1.0, %v347
      %v349 = vmul.f32 %v244, %v333
      %v350 = vmul.f32 %v245, %v348
      %351 = vst [vmem:[%s241] sm:$0xff] %v349
      %352 = vst [vmem:[%s241 + $0x8] sm:$0xff] %v350
      %v353 = vld [vmem:[%s232] sm:$0xff]
      %v354 = vld [vmem:[%s232 + $0x8] sm:$0xff]
      %s355 = sadd.s32 %s243, 8
      %s356 = scalar_lea.vmem %s2, %s355
      %v357 = vld [vmem:[%s356] sm:$0xff]
      %359 = vset.pattern.permute.xlu0 0
      %360 = vperm.xlu0 %359, %v353
      %v361 = vpop.permute.xlu0 %360
      %v363 = vsub.f32 %v353, %v361
      %v364 = vsub.f32 %v354, %v361
      %v365 = vadd.f32 %v363, %v364
      %366 = vadd.xlane.f32.xlu0 %v365
      %v367 = vpop.xlane.xlu0 %366
      %v368 = vmul.f32 %v363, %v363
      %v369 = vmul.f32 %v364, %v364
      %v370 = vadd.f32 %v368, %v369
      %371 = vadd.xlane.f32.xlu0 %v370
      %v372 = vpop.xlane.xlu0 %371
      %v373 = vmul.f32 %v367, 0.00390625
      %v374 = vmul.f32 %v372, 0.00390625
      %v375 = vmul.f32 %v373, %v373
      %v376 = vsub.f32 %v374, %v375
      %v377 = vmax.f32 %v376, 0.0
      %v378 = vadd.f32 %v373, %v353
      %v379 = vadd.f32 %v377, 1e-05
      %v380 = vrsqrt.pop %v379
      %v381 = vmul.f32 %v380, %v379
      %v382 = vmul.f32 %v381, %v380
      %v383 = vmul.f32 0.5, %v382
      %v384 = vsub.f32 1.5, %v383
      %v385 = vmul.f32 %v380, %v384
      %vm386 = vweird.f32 %v379
      %vm387 = vweird.f32 %v380
      %vm388 = vmor %vm386, %vm387
      %v389 = vsel %vm388, %v380, %v385
      %v390 = vmul.f32 %v357, %v389
      %392 = vrot.lane.b32.xlu0 %v378, 1
      %v393 = vpop.permute.xlu0 %392
      %v395 = vmul.f32 %v357, %v393
      %397 = vrot.lane.b32.xlu0 %v357, 127
      %v398 = vpop.permute.xlu0 %397
      %v400 = vadd.f32 %v395, %v398
      %v401 = vmul.f32 %v390, %v378
      %403 = vrot.lane.b32.xlu0 %v401, 1
      %v404 = vpop.permute.xlu0 %403
      %v406 = vsub.f32 %v400, %v404
      %408 = vset.pattern.permute.xlu0 0
      %409 = vperm.xlu0 %408, %v390
      %v410 = vpop.permute.xlu0 %409
      %v412 = vmul.f32 %v410, %v353
      %v413 = vmul.f32 %v410, %v354
      %415 = vset.pattern.permute.xlu0 1
      %416 = vperm.xlu0 %415, %v406
      %v417 = vpop.permute.xlu0 %416
      %v419 = vadd.f32 %v412, %v417
      %v420 = vadd.f32 %v413, %v417
      %v421 = vxor.u32 %v419, 2147483648
      %v422 = vxor.u32 %v420, 2147483648
      %v423 = vmul.f32 %v421, 1.442695
      %v424 = vpow.pop %v423
      %v425 = vmul.f32 %v422, 1.442695
      %v426 = vpow.pop %v425
      %v427 = vadd.f32 %v424, 1.0
      %v428 = vadd.f32 %v426, 1.0
      %v429 = vrcp.pop %v427
      %v430 = vmul.f32 %v427, %v429
      %v431 = vsub.f32 1.0, %v430
      %v432 = vmul.f32 %v429, %v431
      %v433 = vadd.f32 %v429, %v432
      %vm434 = vweird.f32 %v427
      %vm435 = vweird.f32 %v429
      %vm436 = vmor %vm434, %vm435
      %v437 = vsel %vm436, %v429, %v433
      %v438 = vand.u32 2147483647, %v427
      %vm439 = vcmp.eq.f32.partialorder %v438, 8.507059e+37
      %v440 = vand.u32 %v427, 2147483648
      %v441 = vor.u32 1.1754944e-38, %v440
      %v442 = vsel %vm439, %v441, %v437
      %v443 = vmul.f32 1.0, %v442
      %v444 = vrcp.pop %v428
      %v445 = vmul.f32 %v428, %v444
      %v446 = vsub.f32 1.0, %v445
      %v447 = vmul.f32 %v444, %v446
      %v448 = vadd.f32 %v444, %v447
      %vm449 = vweird.f32 %v428
      %vm450 = vweird.f32 %v444
      %vm451 = vmor %vm449, %vm450
      %v452 = vsel %vm451, %v444, %v448
      %v453 = vand.u32 2147483647, %v428
      %vm454 = vcmp.eq.f32.partialorder %v453, 8.507059e+37
      %v455 = vand.u32 %v428, 2147483648
      %v456 = vor.u32 1.1754944e-38, %v455
      %v457 = vsel %vm454, %v456, %v452
      %v458 = vmul.f32 1.0, %v457
      %v459 = vmul.f32 %v353, %v443
      %v460 = vmul.f32 %v354, %v458
      %461 = vst [vmem:[%s241 + $0x10] sm:$0xff] %v459
      %462 = vst [vmem:[%s241 + $0x18] sm:$0xff] %v460
      %s463 = sadd.s32 %s18, %s19
      %p464 = scmp.lt.s32.totalorder %s463, 1
      %s465 = scalar_select %p464, %s463, 1
      %s466 = smul.addr %s465, 4
      %s467 = smul.addr %s466, 8
      %s468 = scalar_lea.vmem %s3, %s467
      // Predicated region
      $region33: #{sa_layer_forward.1} parent=31 // pred_check
        %p469 = pneg %p129
      $region34: #{sa_layer_forward.1} parent=31 // pred_check_branch
        %471 = sbr.rel (%p469) target = $region36
      $region35: #{sa_layer_forward.1} parent=31 // pred_region
        %s472 = sadd.s32 %s18, %s19
      $region36: #{sa_layer_forward.1} parent=31 // pred_fallthru
        _
    $region32: #{sa_layer_forward.1} parent=5 // pred_fallthru
      _
    %p473 = scmp.le.s32.totalorder 2, %s9
    // Predicated region
    $region37: #{sa_layer_forward.1} parent=5 // pred_check
      %p474 = pneg %p473
    $region38: #{sa_layer_forward.1} parent=5 // pred_check_branch
      %476 = sbr.rel (%p474) target = $region40
    $region39: #{sa_layer_forward.1} parent=5 // pred_region
      %s477 = ssub.s32 %s9, 2
      // Predicated region
      $region41: #{sa_layer_forward.1} parent=39 // pred_check
        %p478 = pneg %p135
      $region42: #{sa_layer_forward.1} parent=39 // pred_check_branch
        %480 = sbr.rel (%p478) target = $region44
      $region43: #{sa_layer_forward.1} parent=39 // pred_region
        %s481 = sadd.s32 %s20, %s21
        %p482 = scmp.lt.s32.totalorder %s481, 1
        %s483 = scalar_select %p482, %s481, 1
        %s484 = smul.addr %s483, 4
        %s485 = smul.addr %s484, 8
        %s486 = scalar_lea.vmem %s3, %s485
      $region44: #{sa_layer_forward.1} parent=39 // pred_fallthru
        _
    $region40: #{sa_layer_forward.1} parent=5 // pred_fallthru
      _
  $region6: #{sa_layer_forward.1} parent=0 // loop_footer
    %s13 = sadd.s32 1, %s9
  $region7: #{sa_layer_forward.1} parent=0 // loop_footer_branch
    %8 = sbr.rel target = $region3
  $region8: #{sa_layer_forward.1} parent=0 // loop_exit
    _

</llo_original>
